<compile_context>
chip_gen: v5e
topology: v5e:2x2
jax: 0.10.0
libtpu: 0.0.40
codegen_flags: <defaults>
</compile_context>

<pallas_src>
import functools

import jax
import jax.numpy as jnp
from jax.experimental import pallas as pl
from jax.experimental.pallas import tpu as pltpu


def _cdiv(a, b):
    return -(-a // b)


def _weighted_entropy_kernel(*refs, G, M, tn, T, apply_mask):
    """One grid step: add one (tn, L) tile's weighted-entropy contributions into the
    resident (8, L) per-partition output accumulator.

    refs in order:
      scal_ref : SMEM (2,) f32   -> [temp, eps]
      blk_ref  : VMEM (L, L) f32 -> block-diagonal ones (only when G > 1); constant
                                    block index => DMA'd once and kept resident
      p_ref    : VMEM (tn, L)    -> L = G*C; each 128-lane row packs G original rows
      out_ref  : VMEM (8, L) f32 -> accumulator (same output block across the t axis)
    """
    if G > 1:
        scal_ref, blk_ref, p_ref, out_ref = refs
    else:
        scal_ref, p_ref, out_ref = refs

    part = pl.program_id(0)
    t = pl.program_id(1)

    @pl.when(t == 0)
    def _():
        out_ref[...] = jnp.zeros_like(out_ref)

    temp = scal_ref[0]
    eps = scal_ref[1]

    p = p_ref[...].astype(jnp.float32)                        # (tn, L), f32 compute
    L = p.shape[-1]

    if apply_mask:
        # Ragged tail: the last block(s) read packed rows >= M whose contents are
        # unspecified (Pallas does not zero-fill OOB rows of a partial block).  Zero p
        # for those rows BEFORE exp/log so garbage (even NaN/Inf) never enters the sum;
        # a p == 0 row contributes exactly 0 (ent = 0, den = C per group > 0).
        row = (part * T + t) * tn + jax.lax.broadcasted_iota(jnp.int32, (tn, 1), 0)
        p = jnp.where(row < M, p, 0.0)

    # exp(temp*(1-p)) / sum exp(temp*(1-p)) == exp(-temp*p) / sum exp(-temp*p):
    # the exp(temp) factor cancels, and exp(-temp*p) never overflows for p >= 0.
    expo = jnp.exp(-temp * p)
    ent = p * jnp.log(p + eps)                                # p == 0 rows give exactly 0

    if G > 1:
        # Per-original-row (per C-lane group) sums of expo, broadcast back to each
        # group's lanes via the hoisted block-diagonal ones matrix on the idle MXU.
        # blk is exactly 0/1, so the only rounding under HIGHEST comes from splitting
        # expo, which keeps full f32 accuracy.
        den = jnp.dot(expo, blk_ref[...], preferred_element_type=jnp.float32,
                      precision=jax.lax.Precision.HIGHEST)    # (tn, L), > 0
    else:
        den = jnp.sum(expo, axis=-1, keepdims=True)           # (tn, 1), > 0

    # (weight * ent).sum over classes == sum(expo * ent / den), accumulated elementwise.
    # Exact reciprocal keeps the result within 1e-5 of the f32 reference.
    contrib = (expo * ent) * pl.reciprocal(den, approx=False)  # (tn, L)

    # Reduce the tile over 8-row groups and add into the small resident accumulator:
    # values stay in vregs (no (tn, L) scratch vld/vst pass) and 8*L lane-parallel f32
    # partials preserve summation accuracy.
    out_ref[...] += jnp.sum(contrib.reshape(tn // 8, 8, L), axis=0)


def _num_tensorcores():
    """Best-effort TensorCore count addressed by one pallas_call (2 on v7x-style
    megacore parts, 1 on v5e/v6e).  Defensive: falls back to 1 (always correct)."""
    try:
        info = pltpu.get_tpu_info()
        for name in ("num_tensorcores", "tensorcores_per_chip", "num_cores",
                     "cores_per_chip", "core_count"):
            v = getattr(info, name, None)
            if v:
                return int(v)
    except Exception:
        pass
    try:
        if "v7" in jax.devices()[0].device_kind.lower():
            return 2
    except Exception:
        pass
    return 1


def _vmem_capacity_bytes():
    try:
        v = getattr(pltpu.get_tpu_info(), "vmem_capacity_bytes", None)
        if v:
            return int(v)
    except Exception:
        pass
    return 64 * 1024 * 1024            # v7x floor: the safe assumption


def weighted_entropy(p, temp, eps=1e-10, *, num_partitions=None,
                     max_tile_rows=8192, tile_bytes_budget=4 * 1024 * 1024):
    """p: (B, S, C) probabilities (f32 or bf16). Returns scalar f32 mean weighted entropy."""
    B, S, C = p.shape
    N = B * S
    p2 = p.reshape(N, C)               # free metadata reshape

    # ---- Lane packing: put G original rows side by side on the 128-lane axis. ------
    # Works for any C < 128: L = G*C <= 128 equals the packed view's full last dim,
    # which is always a legal block last-dim (full-dim exception).
    G0 = max(1, 128 // C)
    # Prefer a G that divides N so the (N, C) -> (M, L) reshape stays a free bitcast
    # (no extra HBM pass); only pad when that would cost more than 2x lane occupancy.
    G = next((g for g in range(G0, 0, -1) if N % g == 0), 1)
    if G < max(1, G0 // 2):
        G = G0                          # ragged N: pay one small pad instead
    N_pack = _cdiv(N, G) * G
    if N_pack != N:
        # Padded rows are all-zero -> contribute exactly 0; the mean divides by true N.
        p2 = jnp.pad(p2, ((0, N_pack - N), (0, 0)))
    M = N_pack // G                     # packed rows
    L = G * C                           # packed lanes per row
    p_packed = p2.reshape(M, L)         # row-major metadata reshape (no data movement)

    # ---- Partitioning across TensorCores (megacore); 1 on single-TC v5e/v6e. -------
    P = int(num_partitions) if num_partitions else min(_num_tensorcores(), 2)
    P = max(1, min(P, _cdiv(M, 8)))

    # ---- Row-tile size: ~tile_bytes_budget per input buffer, multiple of 8 rows. ----
    itemsize = p.dtype.itemsize
    tn = tile_bytes_budget // (L * itemsize)
    tn = max(8, min(max_tile_rows, (tn // 8) * 8))
    per_part = _cdiv(M, P)
    tn = min(tn, max(8, _cdiv(per_part, 8) * 8))    # never exceed one partition's rows
    T = _cdiv(per_part, tn)                         # grid steps per partition
    num_blocks = _cdiv(M, tn)                       # row-tile indices that touch data
    apply_mask = P * T * tn > M                     # ragged tail -> mask in-kernel

    # Clamp the block index so over-covering logical steps re-read the last valid tile
    # (their rows are masked) instead of addressing a fully out-of-bounds block.
    def row_map(part, t, _T=T, _last=num_blocks - 1):
        return (jnp.minimum(part * _T + t, _last), 0)

    scalars = jnp.array([temp, eps], dtype=jnp.float32)
    in_specs = [pl.BlockSpec(memory_space=pltpu.MemorySpace.SMEM)]   # [temp, eps]
    operands = [scalars]
    if G > 1:
        # Block-diagonal ones matrix, hoisted out of the kernel body: constant block
        # index -> DMA'd once and kept resident in VMEM (no per-step iota/cmp/cast).
        grp = jnp.arange(L, dtype=jnp.int32) // C
        blk = (grp[:, None] == grp[None, :]).astype(jnp.float32)     # (L, L)
        in_specs.append(pl.BlockSpec((L, L), lambda part, t: (0, 0)))
        operands.append(blk)
    in_specs.append(pl.BlockSpec((tn, L), row_map))
    operands.append(p_packed)

    kernel = functools.partial(_weighted_entropy_kernel, G=G, M=M, tn=tn, T=T,
                               apply_mask=apply_mask)

    # VMEM: double-buffered input tile + resident blk + (8, L) output blocks, with
    # headroom; cap at ~3/4 of physical VMEM (48 MiB on v7x, ~96 MiB on v5e/v6e).
    est = (2 * tn * L * itemsize) + (2 * L * L * 4 if G > 1 else 0) + 4 * 8 * L * 4
    vmem_limit = int(min((3 * _vmem_capacity_bytes()) // 4,
                         max(32 * 1024 * 1024, 2 * est)))

    partials = pl.pallas_call(
        kernel,
        out_shape=jax.ShapeDtypeStruct((P * 8, L), jnp.float32),
        grid_spec=pltpu.PrefetchScalarGridSpec(
            num_scalar_prefetch=0,
            grid=(P, T),                                   # (TC partitions, row tiles)
            in_specs=in_specs,
            # Same output block across the t axis -> resident VMEM accumulator;
            # one (8, L) block per partition, summed in the wrapper.
            out_specs=pl.BlockSpec((8, L), lambda part, t: (part, 0)),
        ),
        compiler_params=pltpu.CompilerParams(
            # Leading axis is independent work -> megacore-shardable on 2-TC parts.
            # TODO(synk): if an xprof trace on v7x shows one idle TensorCore, switch
            # this axis to pltpu.CORE_PARALLEL (or drive it via pl.core_map).
            dimension_semantics=("parallel", "arbitrary"),
            vmem_limit_bytes=vmem_limit,
        ),
    )(*operands)

    return -jnp.sum(partials) / jnp.float32(N)


def weighted_entropy_ref(p, temp, eps=1e-10):
    """Pure-JAX reference mirroring the PyTorch module exactly."""
    p = p.astype(jnp.float32)
    expo = jnp.exp(temp * (1.0 - p))
    weight = expo / jnp.sum(expo, axis=2, keepdims=True)
    ent = p * jnp.log(p + eps)
    return jnp.mean(-1.0 * jnp.sum(weight * ent, axis=-1))


if __name__ == "__main__":
    key = jax.random.PRNGKey(0)
    temp = 2.0  # the module's temperature hyperparameter

    k1, k2, k3 = jax.random.split(key, 3)

    # Case 1: small power-of-two class count (C=16) -> lane-packed path (G=8), f32.
    p1 = jax.nn.softmax(jax.random.normal(k1, (2, 8, 16), jnp.float32), axis=-1)
    o1 = jax.block_until_ready(weighted_entropy(p1, temp))
    r1 = jax.block_until_ready(weighted_entropy_ref(p1, temp))
    assert jnp.allclose(o1, r1, rtol=1e-5, atol=1e-6), (o1, r1)

    # Case 2: C=128 (plain lane layout), odd N=15 exercising the in-kernel tail mask.
    p2 = jax.nn.softmax(jax.random.normal(k2, (3, 5, 128), jnp.float32), axis=-1)
    o2 = jax.block_until_ready(weighted_entropy(p2, temp))
    r2 = jax.block_until_ready(weighted_entropy_ref(p2, temp))
    assert jnp.allclose(o2, r2, rtol=1e-5, atol=1e-6), (o2, r2)

    # Case 3: bf16 input streamed as-is from HBM, upcast to f32 inside the kernel.
    p3 = p1.astype(jnp.bfloat16)
    o3 = jax.block_until_ready(weighted_entropy(p3, temp))
    r3 = jax.block_until_ready(weighted_entropy_ref(p3.astype(jnp.float32), temp))
    assert jnp.allclose(o3, r3, rtol=1e-5, atol=1e-6), (o3, r3)

    # Case 4: C=10 (not a divisor of 128) -> generalized packing: G=12 rows, 120 lanes.
    p4 = jax.nn.softmax(jax.random.normal(k3, (2, 6, 10), jnp.float32), axis=-1)
    o4 = jax.block_until_ready(weighted_entropy(p4, temp))
    r4 = jax.block_until_ready(weighted_entropy_ref(p4, temp))
    assert jnp.allclose(o4, r4, rtol=1e-5, atol=1e-6), (o4, r4)

    print("KERNEL_OK")
</pallas_src>

<mosaic_0001>
module attributes {stable_mosaic.version = 11 : i64} {
  func.func @_weighted_entropy_kernel(%arg0: i32, %arg1: i32, %arg2: memref<2xf32, #tpu.memory_space<smem>>, %arg3: memref<128x128xf32, #tpu.memory_space<vmem>>, %arg4: memref<8x128xf32, #tpu.memory_space<vmem>>, %arg5: memref<8x128xf32, #tpu.memory_space<vmem>>) attributes {dimension_semantics = [#tpu.dimension_semantics<parallel>, #tpu.dimension_semantics<arbitrary>], iteration_bounds = array<i64: 1, 1>, scalar_prefetch = 0 : i64, scratch_operands = 0 : i64, tpu.core_type = #tpu.core_type<tc>, window_params = [{transform_indices = @transform_0, window_bounds = array<i64: 2>}, {pipeline_mode = #tpu.pipeline_mode<synchronous>, transform_indices = @transform_1, window_bounds = array<i64: 128, 128>}, {transform_indices = @transform_2, window_bounds = array<i64: 8, 128>}, {transform_indices = @transform_3, window_bounds = array<i64: 8, 128>}]} {
    %c0_i32 = arith.constant 0 : i32
    %0 = arith.cmpi eq, %arg1, %c0_i32 : i32
    %1 = arith.extui %0 : i1 to i32
    %c0_i32_0 = arith.constant 0 : i32
    %2 = arith.cmpi ne, %1, %c0_i32_0 : i32
    scf.if %2 {
      %cst_12 = arith.constant 0.000000e+00 : f32
      %36 = vector.broadcast %cst_12 : f32 to vector<8x128xf32>
      %c0_13 = arith.constant 0 : index
      %c0_14 = arith.constant 0 : index
      %37 = vector.load %arg5[%c0_13, %c0_14] : memref<8x128xf32, #tpu.memory_space<vmem>>, vector<8x128xf32>
      tpu.vector_store %arg5[%c0_13, %c0_14], %36 {strides = array<i32>} : memref<8x128xf32, #tpu.memory_space<vmem>>, vector<8x128xf32>,
    } else {
    }
    %c0 = arith.constant 0 : index
    %3 = memref.load %arg2[%c0] : memref<2xf32, #tpu.memory_space<smem>>
    %c1 = arith.constant 1 : index
    %4 = memref.load %arg2[%c1] : memref<2xf32, #tpu.memory_space<smem>>
    %c0_1 = arith.constant 0 : index
    %c0_2 = arith.constant 0 : index
    %5 = vector.load %arg4[%c0_1, %c0_2] : memref<8x128xf32, #tpu.memory_space<vmem>>, vector<8x128xf32>
    %c1_i32 = arith.constant 1 : i32
    %6 = arith.muli %arg0, %c1_i32 : i32
    %7 = arith.addi %6, %arg1 : i32
    %c8_i32 = arith.constant 8 : i32
    %8 = arith.muli %7, %c8_i32 : i32
    %9 = tpu.iota {dimensions = array<i32: 0>} : vector<8x1xi32>
    %10 = vector.broadcast %8 : i32 to vector<8x1xi32>
    %11 = arith.addi %10, %9 : vector<8x1xi32>
    %c2_i32 = arith.constant 2 : i32
    %12 = vector.broadcast %c2_i32 : i32 to vector<8x1xi32>
    %13 = arith.cmpi slt, %11, %12 : vector<8x1xi32>
    %cst = arith.constant 0.000000e+00 : f32
    %14 = vector.shape_cast %13 : vector<8x1xi1> to vector<8x1xi1>
    %15 = vector.broadcast %14 : vector<8x1xi1> to vector<8x128xi1>
    %16 = vector.broadcast %cst : f32 to vector<8x128xf32>
    %17 = arith.select %15, %5, %16 : vector<8x128xi1>, vector<8x128xf32>
    %cst_3 = arith.constant 0.000000e+00 : f32
    %18 = arith.subf %cst_3, %3 : f32
    %19 = vector.broadcast %18 : f32 to vector<8x128xf32>
    %20 = arith.mulf %19, %17 : vector<8x128xf32>
    %21 = math.exp %20 : vector<8x128xf32>
    %22 = vector.broadcast %4 : f32 to vector<8x128xf32>
    %23 = arith.addf %17, %22 : vector<8x128xf32>
    %24 = math.log %23 : vector<8x128xf32>
    %25 = arith.mulf %17, %24 : vector<8x128xf32>
    %c0_4 = arith.constant 0 : index
    %c0_5 = arith.constant 0 : index
    %26 = vector.load %arg3[%c0_4, %c0_5] : memref<128x128xf32, #tpu.memory_space<vmem>>, vector<128x128xf32>
    %cst_6 = arith.constant dense<0.000000e+00> : vector<8x128xf32>
    %27 = tpu.matmul %21, %26, %cst_6 {dimension_numbers = #tpu.dot_dimension_numbers<[1], [0], [0], [1], [0, 0, 1, 1], [], []>, precision = #tpu.contract_precision<fp32>} : vector<8x128xf32>, vector<128x128xf32>, vector<8x128xf32> -> vector<8x128xf32>
    %28 = arith.mulf %21, %25 : vector<8x128xf32>
    %29 = tpu.reciprocal %27 : vector<8x128xf32> -> vector<8x128xf32>
    %30 = arith.mulf %28, %29 : vector<8x128xf32>
    %c0_7 = arith.constant 0 : index
    %c0_8 = arith.constant 0 : index
    %31 = vector.load %arg5[%c0_7, %c0_8] : memref<8x128xf32, #tpu.memory_space<vmem>>, vector<8x128xf32>
    %32 = vector.shape_cast %30 : vector<8x128xf32> to vector<1x8x128xf32>
    %cst_9 = arith.constant dense<0.000000e+00> : vector<8x128xf32>
    %33 = vector.multi_reduction <add>, %32, %cst_9 [0] : vector<1x8x128xf32> to vector<8x128xf32>
    %34 = arith.addf %31, %33 : vector<8x128xf32>
    %c0_10 = arith.constant 0 : index
    %c0_11 = arith.constant 0 : index
    %35 = vector.load %arg5[%c0_10, %c0_11] : memref<8x128xf32, #tpu.memory_space<vmem>>, vector<8x128xf32>
    tpu.vector_store %arg5[%c0_10, %c0_11], %34 {strides = array<i32>} : memref<8x128xf32, #tpu.memory_space<vmem>>, vector<8x128xf32>,
    return
  }
  func.func @transform_0(%arg0: i32, %arg1: i32) -> i32 {
    %c0_i32 = arith.constant 0 : i32
    %c0_i32_0 = arith.constant 0 : i32
    return %c0_i32 : i32
  }
  func.func @transform_1(%arg0: i32, %arg1: i32) -> (i32, i32) {
    %c0_i32 = arith.constant 0 : i32
    %c0_i32_0 = arith.constant 0 : i32
    %c0_i32_1 = arith.constant 0 : i32
    return %c0_i32, %c0_i32_0 : i32, i32
  }
  func.func @transform_2(%arg0: i32, %arg1: i32) -> (i32, i32) {
    %c1_i32 = arith.constant 1 : i32
    %0 = arith.muli %arg0, %c1_i32 : i32
    %1 = arith.addi %0, %arg1 : i32
    %c0_i32 = arith.constant 0 : i32
    %2 = arith.minsi %1, %c0_i32 : i32
    %c0_i32_0 = arith.constant 0 : i32
    %c0_i32_1 = arith.constant 0 : i32
    return %2, %c0_i32_0 : i32, i32
  }
  func.func @transform_3(%arg0: i32, %arg1: i32) -> (i32, i32) {
    %c0_i32 = arith.constant 0 : i32
    %c0_i32_0 = arith.constant 0 : i32
    return %arg0, %c0_i32 : i32, i32
  }
}

</mosaic_0001>

<llo_original>
// kernel: tpu_custom_call.1
$region0: #{tpu_custom_call.1}
  #allocation0 [shape = 'u32[]', space=smem, size = 0x4, offset = 0x4, fixed_abs, tag = 'smem constant byte address 0x4 - core index']
  #allocation1 [shape = 'u32[72,128]{1,0:T(1,128)}', space=vmem, size = 0x9000, scoped, tag = 'internal scratch']
  %s0 = inlined_call_operand.hbm [shape: f32[2], index: 0, kind: input, shape index: {}]
  %s1 = inlined_call_operand.hbm [shape: f32[128,128], index: 1, kind: input, shape index: {}]
  %s2 = inlined_call_operand.hbm [shape: f32[2,128], index: 2, kind: input, shape index: {}]
  %s3 = inlined_call_operand.hbm [shape: f32[8,128], index: 3, kind: output, shape index: {}]
  %s4 = sld [smem:[#allocation0]]
  $region38: #{tpu_custom_call.1} parent=0
    _
  %s6 = ssub.s32 1, %s4
  %s7 = scalar_select 0, %s6, %s4
  $region1: #{tpu_custom_call.1} parent=0
    #allocation2 [shape = 'u8[512]{0}', space=smem, size = 0x200, scoped, tag = 'input window, operand 0, single buffered']
    #allocation3 [shape = 's32[1]{0}', space=sflag, size = 0x4, scoped, tag = 'scoped memory for tpu_custom_call.1']
    #allocation4 [shape = 's32[1]{0}', space=sflag, size = 0x4, scoped, tag = 'scoped memory for tpu_custom_call.1']
    #allocation5 [shape = 's32[1]{0}', space=sflag, size = 0x4, scoped, tag = 'scoped memory for tpu_custom_call.1']
    #allocation6 [shape = 'u8[65536]{0}', space=vmem, size = 0x10000, scoped, tag = 'input window, operand 1, single buffered']
    #allocation7 [shape = 'u8[4096]{0}', space=vmem, size = 0x1000, scoped, tag = 'input window, operand 2, single buffered']
    #allocation8 [shape = 's32[1]{0}', space=sflag, size = 0x4, scoped, tag = 'scoped memory for tpu_custom_call.1']
    #allocation9 [shape = 'u8[4096]{0}', space=vmem, size = 0x1000, scoped, tag = 'output window, operand 0, single buffered']
    %8 = vsyncpa [#allocation5], 0
    %9 = vsyncpa [#allocation3], 0
    %10 = vsyncpa [#allocation8], 0
    %11 = vsyncpa [#allocation4], 0
    // Predicated region
    $region2: #{tpu_custom_call.1} parent=1 // pred_check
      _
    $region3: #{tpu_custom_call.1} parent=1 // pred_check_branch
      %13 = sbr.rel (0) target = $region5
    $region4: #{tpu_custom_call.1} parent=1 // pred_region
      %15 = vsyncadd [#allocation5], 0
      %s17 = sshll.u32 %s0, 4
      %s18 = int_to_ptr.hbm [resolvable:$true] %s17
      %20 = dma.hbm_to_smem %s18, 16, [#allocation2], [#allocation5]
    $region5: #{tpu_custom_call.1} parent=1 // pred_fallthru
      _
    // Predicated region
    $region6: #{tpu_custom_call.1} parent=1 // pred_check
      _
    $region7: #{tpu_custom_call.1} parent=1 // pred_check_branch
      %22 = sbr.rel (0) target = $region9
    $region8: #{tpu_custom_call.1} parent=1 // pred_region
      %24 = vsyncadd [#allocation3], 0
      %s25 = sshll.u32 %s1, 4
      %s26 = int_to_ptr.hbm [resolvable:$true] %s25
      %s27 = sshll.u32 [#allocation6], 4
      %s28 = int_to_ptr.vmem [resolvable:$true] %s27
      %33 = dma.hbm_to_vmem [thread:$0]  %s26, 2048, %s28, [#allocation3], 128, 128, 8
    $region9: #{tpu_custom_call.1} parent=1 // pred_fallthru
      _
    // Predicated region
    $region10: #{tpu_custom_call.1} parent=1 // pred_check
      _
    $region11: #{tpu_custom_call.1} parent=1 // pred_check_branch
      %35 = sbr.rel (0) target = $region13
    $region12: #{tpu_custom_call.1} parent=1 // pred_region
      %s36 = sadd.s32 0, 0
      %p37 = scmp.lt.s32.totalorder %s36, 0
      %s38 = scalar_select %p37, %s36, 0
      %s39 = smul.u32 4, %s38
      %s40 = ssub.s32 1, %s39
      %s41 = smul.u32 2, %s40
      %s42 = ssub.s32 8, %s41
      %s43 = sshll.u32 %s42, 4
      %44 = vsyncadd [#allocation8], %s43
      %p45 = scmp.ne.s32.totalorder 0, %s41
      %s46 = smul.addr %s39, 2
      %s47 = scalar_lea.hbm %s2, %s46
      %s48 = smul.u32 2, %s40
      %s49 = sshll.u32 %s47, 4
      %s50 = int_to_ptr.hbm [resolvable:$true] %s49
      %s51 = sshll.u32 [#allocation7], 4
      %s52 = int_to_ptr.vmem [resolvable:$true] %s51
      %s53 = sshll.u32 %s48, 4
      %57 = dma.hbm_to_vmem [thread:$0]  (%p45), %s50, %s53, %s52, [#allocation8], 32, 32, 2
    $region13: #{tpu_custom_call.1} parent=1 // pred_fallthru
      _
    // Predicated region
    $region14: #{tpu_custom_call.1} parent=1 // pred_check
      _
    $region15: #{tpu_custom_call.1} parent=1 // pred_check_branch
      %59 = sbr.rel (0) target = $region17
    $region16: #{tpu_custom_call.1} parent=1 // pred_region
      %61 = dma.done [#allocation5], 16
    $region17: #{tpu_custom_call.1} parent=1 // pred_fallthru
      _
    // Predicated region
    $region18: #{tpu_custom_call.1} parent=1 // pred_check
      _
    $region19: #{tpu_custom_call.1} parent=1 // pred_check_branch
      %63 = sbr.rel (0) target = $region21
    $region20: #{tpu_custom_call.1} parent=1 // pred_region
      %65 = dma.done [#allocation3], 2048
    $region21: #{tpu_custom_call.1} parent=1 // pred_fallthru
      _
    // Predicated region
    $region22: #{tpu_custom_call.1} parent=1 // pred_check
      _
    $region23: #{tpu_custom_call.1} parent=1 // pred_check_branch
      %67 = sbr.rel (0) target = $region25
    $region24: #{tpu_custom_call.1} parent=1 // pred_region
      %69 = dma.done [#allocation8], 128
    $region25: #{tpu_custom_call.1} parent=1 // pred_fallthru
      _
    %70 = sfence
    %s71 = sadd.s32 0, 0
    %p72 = scmp.lt.s32.totalorder %s71, 0
    %s73 = scalar_select %p72, %s71, 0
    %s74 = smul.u32 4, %s73
    %s75 = ssub.s32 1, %s74
    %s76 = smul.u32 2, %s75
    %p77 = scmp.eq.s32.totalorder 0, 0
    // Predicated region
    $region26: #{tpu_custom_call.1} parent=1 // pred_check
      %p78 = pneg %p77
    $region27: #{tpu_custom_call.1} parent=1 // pred_check_branch
      %80 = sbr.rel (%p78) target = $region29
    $region28: #{tpu_custom_call.1} parent=1 // pred_region
      %81 = vst [vmem:[#allocation9] sm:$0xff] 0.0
    $region29: #{tpu_custom_call.1} parent=1 // pred_fallthru
      _
    %s82 = sld [smem:[#allocation2]]
    %s83 = sld [smem:[#allocation2 + $0x1]]
    %v84 = vld [vmem:[#allocation7] sm:$0xff]
    %s85 = sadd.s32 0, 0
    %s86 = smul.u32 %s85, 8
    %v87 = vlaneseq
    %v88 = vshrl.u32 %v87, 7
    %v89 = vstv %s86
    %v90 = vadd.s32 %v89, %v88
    %vm91 = vcmp.lt.s32.totalorder %v90, 2
    %v92 = vsel %vm91, 1, 0
    %vm93 = vcmp.eq.s32.totalorder %v92, 1
    %v94 = vsel %vm93, %v84, 0.0
    %s95 = ssub.f32 0.0, %s82
    %v96 = vstv %s95
    %v97 = vmul.f32 %v96, %v94
    %v98 = vmul.f32 %v97, 1.442695
    %v99 = vpow.pop %v98
    %v100 = vstv %s83
    %v101 = vadd.f32 %v94, %v100
    %v102 = vlog2.pop %v101
    %v103 = vmul.f32 %v102, 0.6931472
    %v104 = vmul.f32 %v94, %v103
    %v105 = vld [vmem:[#allocation6] sm:$0xff]
    %v106 = vld [vmem:[#allocation6 + $0x8] sm:$0xff]
    %v107 = vld [vmem:[#allocation6 + $0x10] sm:$0xff]
    %v108 = vld [vmem:[#allocation6 + $0x18] sm:$0xff]
    %v109 = vld [vmem:[#allocation6 + $0x20] sm:$0xff]
    %v110 = vld [vmem:[#allocation6 + $0x28] sm:$0xff]
    %v111 = vld [vmem:[#allocation6 + $0x30] sm:$0xff]
    %v112 = vld [vmem:[#allocation6 + $0x38] sm:$0xff]
    %v113 = vld [vmem:[#allocation6 + $0x40] sm:$0xff]
    %v114 = vld [vmem:[#allocation6 + $0x48] sm:$0xff]
    %v115 = vld [vmem:[#allocation6 + $0x50] sm:$0xff]
    %v116 = vld [vmem:[#allocation6 + $0x58] sm:$0xff]
    %v117 = vld [vmem:[#allocation6 + $0x60] sm:$0xff]
    %v118 = vld [vmem:[#allocation6 + $0x68] sm:$0xff]
    %v119 = vld [vmem:[#allocation6 + $0x70] sm:$0xff]
    %v120 = vld [vmem:[#allocation6 + $0x78] sm:$0xff]
    %v121 = vand.u32 %v120, 4294901760
    %122 = vmatpush.msra.mxu0 %v121
    %v123 = vand.u32 %v119, 4294901760
    %124 = vmatpush.msra.mxu0 %v123
    %v125 = vand.u32 %v118, 4294901760
    %126 = vmatpush.msra.mxu0 %v125
    %v127 = vand.u32 %v117, 4294901760
    %128 = vmatpush.msra.mxu0 %v127
    %v129 = vand.u32 %v116, 4294901760
    %130 = vmatpush.msra.mxu0 %v129
    %v131 = vand.u32 %v115, 4294901760
    %132 = vmatpush.msra.mxu0 %v131
    %v133 = vand.u32 %v114, 4294901760
    %134 = vmatpush.msra.mxu0 %v133
    %v135 = vand.u32 %v113, 4294901760
    %136 = vmatpush.msra.mxu0 %v135
    %v137 = vand.u32 %v112, 4294901760
    %138 = vmatpush.msra.mxu0 %v137
    %v139 = vand.u32 %v111, 4294901760
    %140 = vmatpush.msra.mxu0 %v139
    %v141 = vand.u32 %v110, 4294901760
    %142 = vmatpush.msra.mxu0 %v141
    %v143 = vand.u32 %v109, 4294901760
    %144 = vmatpush.msra.mxu0 %v143
    %v145 = vand.u32 %v108, 4294901760
    %146 = vmatpush.msra.mxu0 %v145
    %v147 = vand.u32 %v107, 4294901760
    %148 = vmatpush.msra.mxu0 %v147
    %v149 = vand.u32 %v106, 4294901760
    %150 = vmatpush.msra.mxu0 %v149
    %v151 = vand.u32 %v105, 4294901760
    %152 = vmatpush.msra.mxu0 %v151
    %v153 = vand.u32 %v99, 4294901760
    %v154 = vsub.f32 %v99, %v153
    %v155 = vand.u32 %v154, 4294901760
    %v156 = vsub.f32 %v154, %v155
    %v157 = vand.u32 %v156, 4294901760
    %158 = vmatmul.f32.gmra.mxu0 %v157
    %v159 = vpop.f32.mrf.mxu0
    %v160 = vadd.f32 0.0, %v159
    %161 = vdwg.mxu0
    %v162 = vand.u32 %v120, 4294901760
    %v163 = vsub.f32 %v120, %v162
    %v164 = vand.u32 %v163, 4294901760
    %v165 = vsub.f32 %v163, %v164
    %v166 = vand.u32 %v165, 4294901760
    %167 = vmatpush.msra.mxu0 %v166
    %v168 = vand.u32 %v119, 4294901760
    %v169 = vsub.f32 %v119, %v168
    %v170 = vand.u32 %v169, 4294901760
    %v171 = vsub.f32 %v169, %v170
    %v172 = vand.u32 %v171, 4294901760
    %173 = vmatpush.msra.mxu0 %v172
    %v174 = vand.u32 %v118, 4294901760
    %v175 = vsub.f32 %v118, %v174
    %v176 = vand.u32 %v175, 4294901760
    %v177 = vsub.f32 %v175, %v176
    %v178 = vand.u32 %v177, 4294901760
    %179 = vmatpush.msra.mxu0 %v178
    %v180 = vand.u32 %v117, 4294901760
    %v181 = vsub.f32 %v117, %v180
    %v182 = vand.u32 %v181, 4294901760
    %v183 = vsub.f32 %v181, %v182
    %v184 = vand.u32 %v183, 4294901760
    %185 = vmatpush.msra.mxu0 %v184
    %v186 = vand.u32 %v116, 4294901760
    %v187 = vsub.f32 %v116, %v186
    %v188 = vand.u32 %v187, 4294901760
    %v189 = vsub.f32 %v187, %v188
    %v190 = vand.u32 %v189, 4294901760
    %191 = vmatpush.msra.mxu0 %v190
    %v192 = vand.u32 %v115, 4294901760
    %v193 = vsub.f32 %v115, %v192
    %v194 = vand.u32 %v193, 4294901760
    %v195 = vsub.f32 %v193, %v194
    %v196 = vand.u32 %v195, 4294901760
    %197 = vmatpush.msra.mxu0 %v196
    %v198 = vand.u32 %v114, 4294901760
    %v199 = vsub.f32 %v114, %v198
    %v200 = vand.u32 %v199, 4294901760
    %v201 = vsub.f32 %v199, %v200
    %v202 = vand.u32 %v201, 4294901760
    %203 = vmatpush.msra.mxu0 %v202
    %v204 = vand.u32 %v113, 4294901760
    %v205 = vsub.f32 %v113, %v204
    %v206 = vand.u32 %v205, 4294901760
    %v207 = vsub.f32 %v205, %v206
    %v208 = vand.u32 %v207, 4294901760
    %209 = vmatpush.msra.mxu0 %v208
    %v210 = vand.u32 %v112, 4294901760
    %v211 = vsub.f32 %v112, %v210
    %v212 = vand.u32 %v211, 4294901760
    %v213 = vsub.f32 %v211, %v212
    %v214 = vand.u32 %v213, 4294901760
    %215 = vmatpush.msra.mxu0 %v214
    %v216 = vand.u32 %v111, 4294901760
    %v217 = vsub.f32 %v111, %v216
    %v218 = vand.u32 %v217, 4294901760
    %v219 = vsub.f32 %v217, %v218
    %v220 = vand.u32 %v219, 4294901760
    %221 = vmatpush.msra.mxu0 %v220
    %v222 = vand.u32 %v110, 4294901760
    %v223 = vsub.f32 %v110, %v222
    %v224 = vand.u32 %v223, 4294901760
    %v225 = vsub.f32 %v223, %v224
    %v226 = vand.u32 %v225, 4294901760
    %227 = vmatpush.msra.mxu0 %v226
    %v228 = vand.u32 %v109, 4294901760
    %v229 = vsub.f32 %v109, %v228
    %v230 = vand.u32 %v229, 4294901760
    %v231 = vsub.f32 %v229, %v230
    %v232 = vand.u32 %v231, 4294901760
    %233 = vmatpush.msra.mxu0 %v232
    %v234 = vand.u32 %v108, 4294901760
    %v235 = vsub.f32 %v108, %v234
    %v236 = vand.u32 %v235, 4294901760
    %v237 = vsub.f32 %v235, %v236
    %v238 = vand.u32 %v237, 4294901760
    %239 = vmatpush.msra.mxu0 %v238
    %v240 = vand.u32 %v107, 4294901760
    %v241 = vsub.f32 %v107, %v240
    %v242 = vand.u32 %v241, 4294901760
    %v243 = vsub.f32 %v241, %v242
    %v244 = vand.u32 %v243, 4294901760
    %245 = vmatpush.msra.mxu0 %v244
    %v246 = vand.u32 %v106, 4294901760
    %v247 = vsub.f32 %v106, %v246
    %v248 = vand.u32 %v247, 4294901760
    %v249 = vsub.f32 %v247, %v248
    %v250 = vand.u32 %v249, 4294901760
    %251 = vmatpush.msra.mxu0 %v250
    %v252 = vand.u32 %v105, 4294901760
    %v253 = vsub.f32 %v105, %v252
    %v254 = vand.u32 %v253, 4294901760
    %v255 = vsub.f32 %v253, %v254
    %v256 = vand.u32 %v255, 4294901760
    %257 = vmatpush.msra.mxu0 %v256
    %v258 = vand.u32 %v99, 4294901760
    %259 = vmatmul.f32.gmra.mxu0 %v258
    %v260 = vpop.f32.mrf.mxu0
    %v261 = vadd.f32 %v160, %v260
    %262 = vdwg.mxu0
    %v263 = vand.u32 %v120, 4294901760
    %v264 = vsub.f32 %v120, %v263
    %265 = vmatpush.msra.mxu0 %v264
    %v266 = vand.u32 %v119, 4294901760
    %v267 = vsub.f32 %v119, %v266
    %268 = vmatpush.msra.mxu0 %v267
    %v269 = vand.u32 %v118, 4294901760
    %v270 = vsub.f32 %v118, %v269
    %271 = vmatpush.msra.mxu0 %v270
    %v272 = vand.u32 %v117, 4294901760
    %v273 = vsub.f32 %v117, %v272
    %274 = vmatpush.msra.mxu0 %v273
    %v275 = vand.u32 %v116, 4294901760
    %v276 = vsub.f32 %v116, %v275
    %277 = vmatpush.msra.mxu0 %v276
    %v278 = vand.u32 %v115, 4294901760
    %v279 = vsub.f32 %v115, %v278
    %280 = vmatpush.msra.mxu0 %v279
    %v281 = vand.u32 %v114, 4294901760
    %v282 = vsub.f32 %v114, %v281
    %283 = vmatpush.msra.mxu0 %v282
    %v284 = vand.u32 %v113, 4294901760
    %v285 = vsub.f32 %v113, %v284
    %286 = vmatpush.msra.mxu0 %v285
    %v287 = vand.u32 %v112, 4294901760
    %v288 = vsub.f32 %v112, %v287
    %289 = vmatpush.msra.mxu0 %v288
    %v290 = vand.u32 %v111, 4294901760
    %v291 = vsub.f32 %v111, %v290
    %292 = vmatpush.msra.mxu0 %v291
    %v293 = vand.u32 %v110, 4294901760
    %v294 = vsub.f32 %v110, %v293
    %295 = vmatpush.msra.mxu0 %v294
    %v296 = vand.u32 %v109, 4294901760
    %v297 = vsub.f32 %v109, %v296
    %298 = vmatpush.msra.mxu0 %v297
    %v299 = vand.u32 %v108, 4294901760
    %v300 = vsub.f32 %v108, %v299
    %301 = vmatpush.msra.mxu0 %v300
    %v302 = vand.u32 %v107, 4294901760
    %v303 = vsub.f32 %v107, %v302
    %304 = vmatpush.msra.mxu0 %v303
    %v305 = vand.u32 %v106, 4294901760
    %v306 = vsub.f32 %v106, %v305
    %307 = vmatpush.msra.mxu0 %v306
    %v308 = vand.u32 %v105, 4294901760
    %v309 = vsub.f32 %v105, %v308
    %310 = vmatpush.msra.mxu0 %v309
    %v311 = vand.u32 %v99, 4294901760
    %v312 = vsub.f32 %v99, %v311
    %313 = vmatmul.f32.gmra.mxu0 %v312
    %v314 = vpop.f32.mrf.mxu0
    %v315 = vadd.f32 %v261, %v314
    %316 = vdwg.mxu0
    %v317 = vand.u32 %v120, 4294901760
    %318 = vmatpush.msra.mxu0 %v317
    %v319 = vand.u32 %v119, 4294901760
    %320 = vmatpush.msra.mxu0 %v319
    %v321 = vand.u32 %v118, 4294901760
    %322 = vmatpush.msra.mxu0 %v321
    %v323 = vand.u32 %v117, 4294901760
    %324 = vmatpush.msra.mxu0 %v323
    %v325 = vand.u32 %v116, 4294901760
    %326 = vmatpush.msra.mxu0 %v325
    %v327 = vand.u32 %v115, 4294901760
    %328 = vmatpush.msra.mxu0 %v327
    %v329 = vand.u32 %v114, 4294901760
    %330 = vmatpush.msra.mxu0 %v329
    %v331 = vand.u32 %v113, 4294901760
    %332 = vmatpush.msra.mxu0 %v331
    %v333 = vand.u32 %v112, 4294901760
    %334 = vmatpush.msra.mxu0 %v333
    %v335 = vand.u32 %v111, 4294901760
    %336 = vmatpush.msra.mxu0 %v335
    %v337 = vand.u32 %v110, 4294901760
    %338 = vmatpush.msra.mxu0 %v337
    %v339 = vand.u32 %v109, 4294901760
    %340 = vmatpush.msra.mxu0 %v339
    %v341 = vand.u32 %v108, 4294901760
    %342 = vmatpush.msra.mxu0 %v341
    %v343 = vand.u32 %v107, 4294901760
    %344 = vmatpush.msra.mxu0 %v343
    %v345 = vand.u32 %v106, 4294901760
    %346 = vmatpush.msra.mxu0 %v345
    %v347 = vand.u32 %v105, 4294901760
    %348 = vmatpush.msra.mxu0 %v347
    %v349 = vand.u32 %v99, 4294901760
    %v350 = vsub.f32 %v99, %v349
    %v351 = vand.u32 %v350, 4294901760
    %352 = vmatmul.f32.gmra.mxu0 %v351
    %v353 = vpop.f32.mrf.mxu0
    %v354 = vadd.f32 %v315, %v353
    %355 = vdwg.mxu0
    %v356 = vand.u32 %v120, 4294901760
    %v357 = vsub.f32 %v120, %v356
    %v358 = vand.u32 %v357, 4294901760
    %359 = vmatpush.msra.mxu0 %v358
    %v360 = vand.u32 %v119, 4294901760
    %v361 = vsub.f32 %v119, %v360
    %v362 = vand.u32 %v361, 4294901760
    %363 = vmatpush.msra.mxu0 %v362
    %v364 = vand.u32 %v118, 4294901760
    %v365 = vsub.f32 %v118, %v364
    %v366 = vand.u32 %v365, 4294901760
    %367 = vmatpush.msra.mxu0 %v366
    %v368 = vand.u32 %v117, 4294901760
    %v369 = vsub.f32 %v117, %v368
    %v370 = vand.u32 %v369, 4294901760
    %371 = vmatpush.msra.mxu0 %v370
    %v372 = vand.u32 %v116, 4294901760
    %v373 = vsub.f32 %v116, %v372
    %v374 = vand.u32 %v373, 4294901760
    %375 = vmatpush.msra.mxu0 %v374
    %v376 = vand.u32 %v115, 4294901760
    %v377 = vsub.f32 %v115, %v376
    %v378 = vand.u32 %v377, 4294901760
    %379 = vmatpush.msra.mxu0 %v378
    %v380 = vand.u32 %v114, 4294901760
    %v381 = vsub.f32 %v114, %v380
    %v382 = vand.u32 %v381, 4294901760
    %383 = vmatpush.msra.mxu0 %v382
    %v384 = vand.u32 %v113, 4294901760
    %v385 = vsub.f32 %v113, %v384
    %v386 = vand.u32 %v385, 4294901760
    %387 = vmatpush.msra.mxu0 %v386
    %v388 = vand.u32 %v112, 4294901760
    %v389 = vsub.f32 %v112, %v388
    %v390 = vand.u32 %v389, 4294901760
    %391 = vmatpush.msra.mxu0 %v390
    %v392 = vand.u32 %v111, 4294901760
    %v393 = vsub.f32 %v111, %v392
    %v394 = vand.u32 %v393, 4294901760
    %395 = vmatpush.msra.mxu0 %v394
    %v396 = vand.u32 %v110, 4294901760
    %v397 = vsub.f32 %v110, %v396
    %v398 = vand.u32 %v397, 4294901760
    %399 = vmatpush.msra.mxu0 %v398
    %v400 = vand.u32 %v109, 4294901760
    %v401 = vsub.f32 %v109, %v400
    %v402 = vand.u32 %v401, 4294901760
    %403 = vmatpush.msra.mxu0 %v402
    %v404 = vand.u32 %v108, 4294901760
    %v405 = vsub.f32 %v108, %v404
    %v406 = vand.u32 %v405, 4294901760
    %407 = vmatpush.msra.mxu0 %v406
    %v408 = vand.u32 %v107, 4294901760
    %v409 = vsub.f32 %v107, %v408
    %v410 = vand.u32 %v409, 4294901760
    %411 = vmatpush.msra.mxu0 %v410
    %v412 = vand.u32 %v106, 4294901760
    %v413 = vsub.f32 %v106, %v412
    %v414 = vand.u32 %v413, 4294901760
    %415 = vmatpush.msra.mxu0 %v414
    %v416 = vand.u32 %v105, 4294901760
    %v417 = vsub.f32 %v105, %v416
    %v418 = vand.u32 %v417, 4294901760
    %419 = vmatpush.msra.mxu0 %v418
    %v420 = vand.u32 %v99, 4294901760
    %421 = vmatmul.f32.gmra.mxu0 %v420
    %v422 = vpop.f32.mrf.mxu0
    %v423 = vadd.f32 %v354, %v422
    %424 = vdwg.mxu0
    %v425 = vand.u32 %v120, 4294901760
    %426 = vmatpush.msra.mxu0 %v425
    %v427 = vand.u32 %v119, 4294901760
    %428 = vmatpush.msra.mxu0 %v427
    %v429 = vand.u32 %v118, 4294901760
    %430 = vmatpush.msra.mxu0 %v429
    %v431 = vand.u32 %v117, 4294901760
    %432 = vmatpush.msra.mxu0 %v431
    %v433 = vand.u32 %v116, 4294901760
    %434 = vmatpush.msra.mxu0 %v433
    %v435 = vand.u32 %v115, 4294901760
    %436 = vmatpush.msra.mxu0 %v435
    %v437 = vand.u32 %v114, 4294901760
    %438 = vmatpush.msra.mxu0 %v437
    %v439 = vand.u32 %v113, 4294901760
    %440 = vmatpush.msra.mxu0 %v439
    %v441 = vand.u32 %v112, 4294901760
    %442 = vmatpush.msra.mxu0 %v441
    %v443 = vand.u32 %v111, 4294901760
    %444 = vmatpush.msra.mxu0 %v443
    %v445 = vand.u32 %v110, 4294901760
    %446 = vmatpush.msra.mxu0 %v445
    %v447 = vand.u32 %v109, 4294901760
    %448 = vmatpush.msra.mxu0 %v447
    %v449 = vand.u32 %v108, 4294901760
    %450 = vmatpush.msra.mxu0 %v449
    %v451 = vand.u32 %v107, 4294901760
    %452 = vmatpush.msra.mxu0 %v451
    %v453 = vand.u32 %v106, 4294901760
    %454 = vmatpush.msra.mxu0 %v453
    %v455 = vand.u32 %v105, 4294901760
    %456 = vmatpush.msra.mxu0 %v455
    %v457 = vand.u32 %v99, 4294901760
    %458 = vmatmul.f32.gmra.mxu0 %v457
    %v459 = vpop.f32.mrf.mxu0
    %v460 = vadd.f32 %v423, %v459
    %461 = vdwg.mxu0
    %v462 = vmul.f32 %v99, %v104
    %v463 = vrcp.pop %v460
    %v464 = vmul.f32 %v460, %v463
    %v465 = vsub.f32 1.0, %v464
    %v466 = vmul.f32 %v463, %v465
    %v467 = vadd.f32 %v463, %v466
    %vm468 = vweird.f32 %v460
    %vm469 = vweird.f32 %v463
    %vm470 = vmor %vm468, %vm469
    %v471 = vsel %vm470, %v463, %v467
    %v472 = vand.u32 2147483647, %v460
    %vm473 = vcmp.eq.f32.partialorder %v472, 8.507059e+37
    %v474 = vand.u32 %v460, 2147483648
    %v475 = vor.u32 1.1754944e-38, %v474
    %v476 = vsel %vm473, %v475, %v471
    %v477 = vmul.f32 %v462, %v476
    %v478 = vld [vmem:[#allocation9] sm:$0xff]
    %v479 = vadd.f32 %v477, 0.0
    %v480 = vadd.f32 %v478, %v479
    %481 = vst [vmem:[#allocation9] sm:$0xff] %v480
    // Predicated region
    $region30: #{tpu_custom_call.1} parent=1 // pred_check
      _
    $region31: #{tpu_custom_call.1} parent=1 // pred_check_branch
      %483 = sbr.rel (0) target = $region33
    $region32: #{tpu_custom_call.1} parent=1 // pred_region
      %485 = vsyncadd [#allocation4], 0
      %s487 = sshll.u32 [#allocation9], 4
      %s488 = int_to_ptr.vmem [resolvable:$true] %s487
      %s489 = sshll.u32 %s3, 4
      %s490 = int_to_ptr.hbm [resolvable:$true] %s489
      %492 = dma.vmem_to_hbm [thread:$0]  %s488, 128, %s490, [#allocation4]
    $region33: #{tpu_custom_call.1} parent=1 // pred_fallthru
      _
    // Predicated region
    $region34: #{tpu_custom_call.1} parent=1 // pred_check
      _
    $region35: #{tpu_custom_call.1} parent=1 // pred_check_branch
      %494 = sbr.rel (0) target = $region37
    $region36: #{tpu_custom_call.1} parent=1 // pred_region
      %496 = dma.done [#allocation4], 128
    $region37: #{tpu_custom_call.1} parent=1 // pred_fallthru
      _
    %497 = vsyncpa [#allocation3], 1
    %498 = vsyncpa [#allocation8], 1
    %499 = vsyncpa [#allocation4], 1
    %500 = vsyncpa [#allocation5], 1

</llo_original>
